<compile_context>
chip_gen: v7x
topology: tpu7x:2x2x1
jax: 0.10.0
libtpu: 0.0.40
codegen_flags: <defaults>
</compile_context>

<pallas_src>
import functools
import math

import jax
import jax.numpy as jnp
from jax.experimental import pallas as pl
from jax.experimental.pallas import tpu as pltpu


def _round_up(x, m):
    return (x + m - 1) // m * m


def _vmem_bytes(shape, dtype, buffers=1):
    """Rough padded VMEM footprint of `buffers` copies of a block."""
    padded = list(shape)
    if len(padded) >= 2:
        padded[-1] = _round_up(padded[-1], 128)
        padded[-2] = _round_up(padded[-2], 8)
    elif padded:
        padded[-1] = _round_up(padded[-1], 128)
    n = 1
    for d in padded:
        n *= d
    return buffers * n * jnp.dtype(dtype).itemsize


def _pick_seq_tile(s, pref=256):
    """Largest multiple of 128 <= pref dividing s; else the full s (single tile)."""
    if s <= pref:
        return s
    t = (pref // 128) * 128
    while t >= 128:
        if s % t == 0:
            return t
        t -= 128
    return s   # uncommon S (not a multiple of 128): fall back to one kv tile


def _pick_head_group(h, d_k, d_model):
    """Pack hb heads per grid step so the block width hb*d_k is lane-dense."""
    hb = max(1, min(h, 128 // d_k)) if d_k < 128 else 1
    while h % hb:
        hb -= 1
    hd = hb * d_k
    if hd % 128 != 0 and hd != d_model:
        hb, hd = h, d_model          # rare fallback: all heads in one full-width block
    return hb, hd


# ---------------------------------------------------------------------------
# Projection (Linear) kernel:  y = x @ W + b
# ---------------------------------------------------------------------------
def _linear_kernel(x_ref, w_ref, b_ref, o_ref):
    acc = jnp.dot(x_ref[...], w_ref[...], preferred_element_type=jnp.float32)
    o_ref[...] = (acc + b_ref[...]).astype(o_ref.dtype)


def _linear(x2, w, b, *, out_dtype=None, block_m=512, block_n=512):
    """x2: (M, d_in), w: (d_in, d_out), b: (d_out,) -> (M, d_out)."""
    M, d_in = x2.shape
    d_out = w.shape[1]
    if out_dtype is None:
        out_dtype = x2.dtype

    bm = min(block_m, _round_up(M, 8))
    if d_out <= block_n:
        bn = d_out
    else:
        bn = _pick_seq_tile(d_out, block_n)        # multiple of 128 or full d_out

    n_m = pl.cdiv(M, bm)
    n_n = pl.cdiv(d_out, bn)

    need = (_vmem_bytes((bm, d_in), x2.dtype, 2)
            + _vmem_bytes((d_in, bn), w.dtype, 2)
            + _vmem_bytes((1, bn), jnp.float32, 2)
            + _vmem_bytes((bm, bn), out_dtype, 2))
    vmem_limit = int(min(max(need + (8 << 20), 32 << 20), 128 << 20))

    # NOTE: W/b could additionally use pipeline_mode=pl.Buffered(1) (single
    # buffer) to halve their VMEM footprint; omitted for broad compatibility.
    return pl.pallas_call(
        _linear_kernel,
        out_shape=jax.ShapeDtypeStruct((M, d_out), out_dtype),
        grid_spec=pltpu.PrefetchScalarGridSpec(
            num_scalar_prefetch=0,
            # rows innermost so the W/bias tile stays resident across the row sweep
            grid=(n_n, n_m),
            in_specs=[
                pl.BlockSpec((bm, d_in), lambda j, i: (i, 0)),
                pl.BlockSpec((d_in, bn), lambda j, i: (0, j)),
                pl.BlockSpec((1, bn), lambda j, i: (0, j)),
            ],
            out_specs=pl.BlockSpec((bm, bn), lambda j, i: (i, j)),
        ),
        compiler_params=pltpu.CompilerParams(
            dimension_semantics=("parallel", "parallel"),
            vmem_limit_bytes=vmem_limit),
    )(x2, w, b.reshape(1, d_out).astype(jnp.float32))


# ---------------------------------------------------------------------------
# Flash-style attention kernel (online softmax over kv tiles)
# ---------------------------------------------------------------------------
def _attn_body(q_ref, k_ref, v_ref, m_ref, o_ref, m_sc, l_sc, acc_sc, *,
               scale, hb, d_k):
    kv = pl.program_id(2)

    @pl.when(kv == 0)
    def _():
        m_sc[...] = jnp.full_like(m_sc, -jnp.inf)
        l_sc[...] = jnp.zeros_like(l_sc)
        acc_sc[...] = jnp.zeros_like(acc_sc)

    q = q_ref[...] * scale                 # pre-scale q: O(tq*hd), not O(tq*tk)
    k = k_ref[...]
    v = v_ref[...]
    masked = (m_ref[...] == 0) if m_ref is not None else None   # (tq, tk) bool

    for hh in range(hb):                   # static unrolled loop over packed heads
        sl = slice(hh * d_k, (hh + 1) * d_k)
        s = jax.lax.dot_general(q[:, sl], k[:, sl], (((1,), (1,)), ((), ())),
                                preferred_element_type=jnp.float32)   # (tq, tk)
        if masked is not None:
            s = jnp.where(masked, jnp.float32(-1e9), s)

        m_prev = m_sc[hh]                                   # (tq, 1)
        m_new = jnp.maximum(m_prev, jnp.max(s, axis=-1, keepdims=True))
        alpha = jnp.exp(m_prev - m_new)
        p = jnp.exp(s - m_new)                              # (tq, tk) f32
        l_sc[hh] = alpha * l_sc[hh] + jnp.sum(p, axis=-1, keepdims=True)
        acc_sc[hh] = alpha * acc_sc[hh] + jnp.dot(
            p.astype(v.dtype), v[:, sl], preferred_element_type=jnp.float32)
        m_sc[hh] = m_new

    @pl.when(kv == pl.num_programs(2) - 1)
    def _():
        # normalize the (tq, d_k) accumulators (not the (tq, tk) probs); EUP recip
        parts = [acc_sc[hh] * pl.reciprocal(l_sc[hh], approx=True)
                 for hh in range(hb)]
        out = parts[0] if hb == 1 else jnp.concatenate(parts, axis=-1)
        o_ref[...] = out.astype(o_ref.dtype)


def _attn_kernel_masked(q_ref, k_ref, v_ref, m_ref, o_ref, m_sc, l_sc, acc_sc,
                        *, scale, hb, d_k):
    _attn_body(q_ref, k_ref, v_ref, m_ref, o_ref, m_sc, l_sc, acc_sc,
               scale=scale, hb=hb, d_k=d_k)


def _attn_kernel_nomask(q_ref, k_ref, v_ref, o_ref, m_sc, l_sc, acc_sc,
                        *, scale, hb, d_k):
    _attn_body(q_ref, k_ref, v_ref, None, o_ref, m_sc, l_sc, acc_sc,
               scale=scale, hb=hb, d_k=d_k)


def _attention(q_src, k_src, v_src, mask_i8, *, S, D, d_k, hb, n_hg, col_off,
               out_dtype):
    """q/k/v_src: (B, S, *) projection buffers; head slices taken via BlockSpecs."""
    B = q_src.shape[0]
    hd = hb * d_k
    tq = _pick_seq_tile(S)
    tk = _pick_seq_tile(S)
    n_q, n_kv = S // tq, S // tk
    oq, ok, ov = col_off
    scale = 1.0 / math.sqrt(d_k)

    def qmap(bg, qi, kv):
        return (bg // n_hg, qi, oq + bg % n_hg)

    def kmap(bg, qi, kv):
        return (bg // n_hg, kv, ok + bg % n_hg)

    def vmap(bg, qi, kv):
        return (bg // n_hg, kv, ov + bg % n_hg)

    def omap(bg, qi, kv):
        return (bg // n_hg, qi, bg % n_hg)

    in_specs = [pl.BlockSpec((None, tq, hd), qmap),
                pl.BlockSpec((None, tk, hd), kmap),
                pl.BlockSpec((None, tk, hd), vmap)]
    args = [q_src, k_src, v_src]
    if mask_i8 is not None:
        in_specs.append(
            pl.BlockSpec((None, tq, tk), lambda bg, qi, kv: (bg // n_hg, qi, kv)))
        args.append(mask_i8)
        kernel = functools.partial(_attn_kernel_masked, scale=scale, hb=hb, d_k=d_k)
    else:
        kernel = functools.partial(_attn_kernel_nomask, scale=scale, hb=hb, d_k=d_k)

    need = (_vmem_bytes((tq, hd), q_src.dtype, 2)
            + 2 * _vmem_bytes((tk, hd), k_src.dtype, 2)
            + _vmem_bytes((tq, hd), out_dtype, 2)
            + 2 * _vmem_bytes((hb, tq, 1), jnp.float32)
            + _vmem_bytes((hb, tq, d_k), jnp.float32))
    if mask_i8 is not None:
        need += _vmem_bytes((tq, tk), jnp.int8, 2)
    vmem_limit = int(min(max(need + (8 << 20), 32 << 20), 128 << 20))

    return pl.pallas_call(
        kernel,
        out_shape=jax.ShapeDtypeStruct((B, S, D), out_dtype),
        grid_spec=pltpu.PrefetchScalarGridSpec(
            num_scalar_prefetch=0,
            grid=(B * n_hg, n_q, n_kv),        # (batch,head-group) flattened: megacore-friendly
            in_specs=in_specs,
            out_specs=pl.BlockSpec((None, tq, hd), omap),
            scratch_shapes=[pltpu.VMEM((hb, tq, 1), jnp.float32),   # running max m
                            pltpu.VMEM((hb, tq, 1), jnp.float32),   # running denom l
                            pltpu.VMEM((hb, tq, d_k), jnp.float32)]),  # acc
        compiler_params=pltpu.CompilerParams(
            dimension_semantics=("parallel", "parallel", "arbitrary"),
            vmem_limit_bytes=vmem_limit),
    )(*args)


# ---------------------------------------------------------------------------
# Full MultiHeadedAttention forward
# ---------------------------------------------------------------------------
def multi_headed_attention(query, key, value, params, *, h, mask=None,
                           operand_dtype=None, block_m=512):
    """query/key/value: (B, S, d_model).  mask: (B,S,S) / (B,1,S) / (S,S); nonzero=keep."""
    B, S, D = query.shape
    assert D % h == 0, "d_model must be divisible by h"
    d_k = D // h
    self_attn = (key is query) and (value is query)
    in_dtype = query.dtype
    proj_dtype = jnp.dtype(operand_dtype) if operand_dtype is not None else in_dtype

    (wq, bq), (wk, bk), (wv, bv), (wo, bo) = params
    if operand_dtype is not None:
        # cast once per forward; store params in operand_dtype to skip even this
        wq, wk, wv, wo = (w.astype(proj_dtype) for w in (wq, wk, wv, wo))

    hb, hd = _pick_head_group(h, d_k, D)
    n_hg = h // hb

    if self_attn:
        # Fused QKV projection: activations read once, one GEMM with 3x wider N.
        x2 = query.reshape(B * S, D)
        if operand_dtype is not None:
            x2 = x2.astype(proj_dtype)
        wqkv = jnp.concatenate([wq, wk, wv], axis=1)            # (D, 3D)
        bqkv = jnp.concatenate([bq, bk, bv], axis=0)            # (3D,)
        qkv = _linear(x2, wqkv, bqkv, out_dtype=proj_dtype, block_m=block_m)
        if hd % 128 == 0:
            # lane-dense head-group blocks can index the fused buffer directly
            q_src = k_src = v_src = qkv.reshape(B, S, 3 * D)
            col_off = (0, D // hd, (2 * D) // hd)
        else:
            q_src = qkv[:, :D].reshape(B, S, D)
            k_src = qkv[:, D:2 * D].reshape(B, S, D)
            v_src = qkv[:, 2 * D:].reshape(B, S, D)
            col_off = (0, 0, 0)
    else:
        def proj(x, w, b):
            x2 = x.reshape(B * S, D)
            if operand_dtype is not None:
                x2 = x2.astype(proj_dtype)
            return _linear(x2, w, b, out_dtype=proj_dtype,
                           block_m=block_m).reshape(B, S, D)
        q_src = proj(query, wq, bq)
        k_src = proj(key, wk, bk)
        v_src = proj(value, wv, bv)
        col_off = (0, 0, 0)

    mask_i8 = None
    if mask is not None:
        mask_i8 = (jnp.broadcast_to(mask, (B, S, S)) != 0).astype(jnp.int8)

    # Attention writes its output directly in (B, S, D) merged-head layout.
    ctx = _attention(q_src, k_src, v_src, mask_i8, S=S, D=D, d_k=d_k, hb=hb,
                     n_hg=n_hg, col_off=col_off, out_dtype=proj_dtype)

    out = _linear(ctx.reshape(B * S, D), wo, bo, out_dtype=in_dtype,
                  block_m=block_m)
    return out.reshape(B, S, D)


# ---------------------------------------------------------------------------
# Parameter init (mimics nn.Linear uniform(-1/sqrt(fan_in), 1/sqrt(fan_in)))
# ---------------------------------------------------------------------------
def _init_params(rng, d_model, dtype=jnp.float32):
    bound = 1.0 / (d_model ** 0.5)
    params = []
    for i in range(4):
        kw, kb = jax.random.split(jax.random.fold_in(rng, i))
        w = jax.random.uniform(kw, (d_model, d_model), dtype, -bound, bound)
        b = jax.random.uniform(kb, (d_model,), dtype, -bound, bound)
        params.append((w, b))
    return tuple(params)


# ---------------------------------------------------------------------------
# Pure-JAX reference (same math, eval-mode dropout)
# ---------------------------------------------------------------------------
def _reference_mha(query, key, value, params, h, mask):
    B, S, D = query.shape
    d_k = D // h
    (wq, bq), (wk, bk), (wv, bv), (wo, bo) = params
    hi = jax.lax.Precision.HIGHEST

    def lin(x, w, b):
        return jnp.dot(x, w, precision=hi) + b

    q = lin(query, wq, bq).reshape(B, S, h, d_k).transpose(0, 2, 1, 3)
    k = lin(key, wk, bk).reshape(B, S, h, d_k).transpose(0, 2, 1, 3)
    v = lin(value, wv, bv).reshape(B, S, h, d_k).transpose(0, 2, 1, 3)

    s = jnp.einsum("bhqd,bhkd->bhqk", q, k, precision=hi) / math.sqrt(d_k)
    if mask is not None:
        m = jnp.broadcast_to(mask, (B, S, S))
        s = jnp.where(m[:, None, :, :] == 0, -1e9, s)
    p = jax.nn.softmax(s, axis=-1)
    o = jnp.einsum("bhqk,bhkd->bhqd", p, v, precision=hi)
    o = o.transpose(0, 2, 1, 3).reshape(B, S, D)
    return lin(o, wo, bo)


if __name__ == "__main__":
    rng = jax.random.PRNGKey(0)

    # --- Config A: self-attention, tiny d_model (fused QKV, head-group = full D) ---
    B, S, D, H = 2, 8, 32, 4
    k1, k2 = jax.random.split(rng)
    x = jax.random.normal(k1, (B, S, D), jnp.float32)
    params = _init_params(k2, D)
    mask = jnp.broadcast_to(jnp.tril(jnp.ones((S, S), jnp.int32)), (B, S, S))

    y = multi_headed_attention(x, x, x, params, h=H, mask=mask)
    y = jax.block_until_ready(y)
    y_ref = _reference_mha(x, x, x, params, H, mask)
    assert y.shape == (B, S, D)
    # tolerance covers MXU pass ordering + approximate EUP reciprocal
    assert jnp.allclose(y, y_ref, atol=2e-2, rtol=2e-2), (
        float(jnp.max(jnp.abs(y - y_ref))))

    # --- Config B: self-attention, d_model=128 (direct head-sliced fused path, no mask) ---
    B2, S2, D2, H2 = 2, 16, 128, 2
    k3, k4 = jax.random.split(jax.random.fold_in(rng, 1))
    x2 = jax.random.normal(k3, (B2, S2, D2), jnp.float32)
    params2 = _init_params(k4, D2)
    y2 = multi_headed_attention(x2, x2, x2, params2, h=H2, mask=None)
    y2 = jax.block_until_ready(y2)
    y2_ref = _reference_mha(x2, x2, x2, params2, H2, None)
    assert jnp.allclose(y2, y2_ref, atol=2e-2, rtol=2e-2), (
        float(jnp.max(jnp.abs(y2 - y2_ref))))

    # --- Config C: cross-attention (separate projections) + (B,1,S) key-padding mask ---
    k5, k6, k7 = jax.random.split(jax.random.fold_in(rng, 2), 3)
    q_in = jax.random.normal(k5, (B, S, D), jnp.float32)
    kv_in = jax.random.normal(k6, (B, S, D), jnp.float32)
    pad = (jax.random.uniform(k7, (B, 1, S)) > 0.3).astype(jnp.int32)
    pad = pad.at[:, :, 0].set(1)
    y3 = multi_headed_attention(q_in, kv_in, kv_in, params, h=H, mask=pad)
    y3 = jax.block_until_ready(y3)
    y3_ref = _reference_mha(q_in, kv_in, kv_in, params, H, pad)
    assert jnp.allclose(y3, y3_ref, atol=2e-2, rtol=2e-2), (
        float(jnp.max(jnp.abs(y3 - y3_ref))))

    # --- bf16 MXU-operand path (f32 accumulation / softmax), loose check ---
    y_bf = multi_headed_attention(x, x, x, params, h=H, mask=mask,
                                  operand_dtype=jnp.bfloat16)
    y_bf = jax.block_until_ready(y_bf)
    assert y_bf.dtype == jnp.float32
    assert jnp.allclose(y_bf, y_ref, atol=1e-1, rtol=1e-1), (
        float(jnp.max(jnp.abs(y_bf - y_ref))))

    print("KERNEL_OK")
</pallas_src>

<mosaic_0001>
module attributes {stable_mosaic.version = 11 : i64} {
  func.func @_linear_kernel(%arg0: i32, %arg1: i32, %arg2: memref<16x32xf32, #tpu.memory_space<vmem>>, %arg3: memref<32x96xf32, #tpu.memory_space<vmem>>, %arg4: memref<1x96xf32, #tpu.memory_space<vmem>>, %arg5: memref<16x96xf32, #tpu.memory_space<vmem>>) attributes {dimension_semantics = [#tpu.dimension_semantics<parallel>, #tpu.dimension_semantics<parallel>], iteration_bounds = array<i64: 1, 1>, scalar_prefetch = 0 : i64, scratch_operands = 0 : i64, tpu.core_type = #tpu.core_type<tc>, window_params = [{transform_indices = @transform_0, window_bounds = array<i64: 16, 32>}, {transform_indices = @transform_1, window_bounds = array<i64: 32, 96>}, {transform_indices = @transform_2, window_bounds = array<i64: 1, 96>}, {transform_indices = @transform_3, window_bounds = array<i64: 16, 96>}]} {
    %c0 = arith.constant 0 : index
    %c0_0 = arith.constant 0 : index
    %0 = vector.load %arg2[%c0, %c0_0] : memref<16x32xf32, #tpu.memory_space<vmem>>, vector<16x32xf32>
    %c0_1 = arith.constant 0 : index
    %c0_2 = arith.constant 0 : index
    %1 = vector.load %arg3[%c0_1, %c0_2] : memref<32x96xf32, #tpu.memory_space<vmem>>, vector<32x96xf32>
    %cst = arith.constant dense<0.000000e+00> : vector<16x96xf32>
    %2 = tpu.matmul %0, %1, %cst {dimension_numbers = #tpu.dot_dimension_numbers<[1], [0], [0], [1], [0, 0, 1, 1], [], []>} : vector<16x32xf32>, vector<32x96xf32>, vector<16x96xf32> -> vector<16x96xf32>
    %c0_3 = arith.constant 0 : index
    %c0_4 = arith.constant 0 : index
    %3 = vector.load %arg4[%c0_3, %c0_4] : memref<1x96xf32, #tpu.memory_space<vmem>>, vector<1x96xf32>
    %4 = vector.broadcast %3 : vector<1x96xf32> to vector<16x96xf32>
    %5 = arith.addf %2, %4 : vector<16x96xf32>
    %c0_5 = arith.constant 0 : index
    %c0_6 = arith.constant 0 : index
    %6 = vector.load %arg5[%c0_5, %c0_6] : memref<16x96xf32, #tpu.memory_space<vmem>>, vector<16x96xf32>
    tpu.vector_store %arg5[%c0_5, %c0_6], %5 {strides = array<i32>} : memref<16x96xf32, #tpu.memory_space<vmem>>, vector<16x96xf32>,
    return
  }
  func.func @transform_0(%arg0: i32, %arg1: i32) -> (i32, i32) {
    %c0_i32 = arith.constant 0 : i32
    %c0_i32_0 = arith.constant 0 : i32
    return %arg1, %c0_i32 : i32, i32
  }
  func.func @transform_1(%arg0: i32, %arg1: i32) -> (i32, i32) {
    %c0_i32 = arith.constant 0 : i32
    %c0_i32_0 = arith.constant 0 : i32
    return %c0_i32, %arg0 : i32, i32
  }
  func.func @transform_2(%arg0: i32, %arg1: i32) -> (i32, i32) {
    %c0_i32 = arith.constant 0 : i32
    %c0_i32_0 = arith.constant 0 : i32
    return %c0_i32, %arg0 : i32, i32
  }
  func.func @transform_3(%arg0: i32, %arg1: i32) -> (i32, i32) {
    %c0_i32 = arith.constant 0 : i32
    return %arg1, %arg0 : i32, i32
  }
}

</mosaic_0001>

<llo_original>
// kernel: tpu_custom_call.1
$region0: #{tpu_custom_call.1}
  #allocation0 [shape = 'u32[]', space=smem, size = 0x4, offset = 0x4, fixed_abs, tag = 'smem constant byte address 0x4 - core index']
  #allocation1 [shape = 'u32[144,128]{1,0:T(1,128)}', space=vmem, size = 0x12000, scoped, tag = 'internal scratch']
  %s0 = inlined_call_operand.hbm [shape: f32[16,32], index: 0, kind: input, shape index: {}]
  %s1 = inlined_call_operand.hbm [shape: f32[32,96], index: 1, kind: input, shape index: {}]
  %s2 = inlined_call_operand.vmem [shape: f32[1,96], index: 2, kind: input, shape index: {}]
  %s3 = inlined_call_operand.hbm [shape: f32[16,96], index: 3, kind: output, shape index: {}]
  %s4 = sld [smem:[#allocation0]]
  $region30: #{tpu_custom_call.1} parent=0
    _
  %s6 = ssub.s32 1, %s4
  %s7 = scalar_select 0, %s6, %s4
  $region1: #{tpu_custom_call.1} parent=0
    #allocation2 [shape = 'u8[8192]{0}', space=vmem, size = 0x2000, scoped, tag = 'input window, operand 0, single buffered']
    #allocation3 [shape = 's32[1]{0}', space=sflag, size = 0x4, scoped, tag = 'scoped memory for tpu_custom_call.1']
    #allocation4 [shape = 's32[1]{0}', space=sflag, size = 0x4, scoped, tag = 'scoped memory for tpu_custom_call.1']
    #allocation5 [shape = 'u8[16384]{0}', space=vmem, size = 0x4000, scoped, tag = 'input window, operand 1, single buffered']
    #allocation6 [shape = 's32[1]{0}', space=sflag, size = 0x4, scoped, tag = 'scoped memory for tpu_custom_call.1']
    #allocation7 [shape = 'u8[8192]{0}', space=vmem, size = 0x2000, scoped, tag = 'output window, operand 0, single buffered']
    %8 = vsyncpa [#allocation3], 0
    %9 = vsyncpa [#allocation6], 0
    %10 = vsyncpa [#allocation4], 0
    // Predicated region
    $region2: #{tpu_custom_call.1} parent=1 // pred_check
      _
    $region3: #{tpu_custom_call.1} parent=1 // pred_check_branch
      %12 = sbr.rel (0) target = $region5
    $region4: #{tpu_custom_call.1} parent=1 // pred_region
      %s14 = ssub.s32 256, 256
      %15 = vsyncadd [#allocation3], %s14
      %s16 = sshll.u32 [#allocation2], 4
      %s17 = int_to_ptr.vmem [resolvable:$true] %s16
      %22 = dma.hbm_to_vmem [thread:$0]  %s0, 256, %s17, [#allocation3], 128, 128, 8
    $region5: #{tpu_custom_call.1} parent=1 // pred_fallthru
      _
    // Predicated region
    $region6: #{tpu_custom_call.1} parent=1 // pred_check
      _
    $region7: #{tpu_custom_call.1} parent=1 // pred_check_branch
      %24 = sbr.rel (0) target = $region9
    $region8: #{tpu_custom_call.1} parent=1 // pred_region
      %s26 = ssub.s32 512, 512
      %27 = vsyncadd [#allocation6], %s26
      %s28 = sshll.u32 [#allocation5], 4
      %s29 = int_to_ptr.vmem [resolvable:$true] %s28
      %34 = dma.hbm_to_vmem [thread:$0]  %s1, 512, %s29, [#allocation6], 128, 128, 8
    $region9: #{tpu_custom_call.1} parent=1 // pred_fallthru
      _
    // Predicated region
    $region10: #{tpu_custom_call.1} parent=1 // pred_check
      _
    $region11: #{tpu_custom_call.1} parent=1 // pred_check_branch
      %36 = sbr.rel (0) target = $region13
    $region12: #{tpu_custom_call.1} parent=1 // pred_region
      _
    $region13: #{tpu_custom_call.1} parent=1 // pred_fallthru
      _
    // Predicated region
    $region14: #{tpu_custom_call.1} parent=1 // pred_check
      _
    $region15: #{tpu_custom_call.1} parent=1 // pred_check_branch
      %38 = sbr.rel (0) target = $region17
    $region16: #{tpu_custom_call.1} parent=1 // pred_region
      %39 = dma.done [#allocation3], 256
    $region17: #{tpu_custom_call.1} parent=1 // pred_fallthru
      _
    // Predicated region
    $region18: #{tpu_custom_call.1} parent=1 // pred_check
      _
    $region19: #{tpu_custom_call.1} parent=1 // pred_check_branch
      %41 = sbr.rel (0) target = $region21
    $region20: #{tpu_custom_call.1} parent=1 // pred_region
      %42 = dma.done [#allocation6], 512
    $region21: #{tpu_custom_call.1} parent=1 // pred_fallthru
      _
    %v43 = vld [vmem:[#allocation2] sm:$0xff]
    %v44 = vld [vmem:[#allocation2 + $0x8] sm:$0xff]
    %v45 = vld [vmem:[#allocation5] sm:$0xff]
    %v46 = vld [vmem:[#allocation5 + $0x8] sm:$0xff]
    %v47 = vld [vmem:[#allocation5 + $0x10] sm:$0xff]
    %v48 = vld [vmem:[#allocation5 + $0x18] sm:$0xff]
    %v49 = vld [vmem:[%s2] sm:$0x1]
    %v51 = vlaneseq
    %v52 = vshrl.u32 %v51, 7
    %v53 = vsub.s32 0, %v52
    %v54 = vrot.slane %v49, %v53
    %vm56 = vcmask 261120
    %v58 = vsel %vm56, %v43, 0
    %v61 = vsel %vm56, %v44, 0
    %63 = vmatprep.subr.mxu0 0.0
    %64 = vmatpush1.msra.mxu0 %v45
    %65 = vmatprep.subr.mxu0 0.0
    %66 = vmatpush1.msra.mxu0 %v46
    %67 = vmatprep.subr.mxu0 0.0
    %68 = vmatpush1.msra.mxu0 %v47
    %69 = vmatprep.subr.mxu0 0.0
    %70 = vmatpush1.msra.mxu0 %v48
    %71 = vmatprep.subr.mxu0 0.0
    %72 = vmatpush1.msra.mxu0 0.0
    %73 = vmatprep.subr.mxu0 0.0
    %74 = vmatpush1.msra.mxu0 0.0
    %75 = vmatprep.subr.mxu0 0.0
    %76 = vmatpush1.msra.mxu0 0.0
    %77 = vmatprep.subr.mxu0 0.0
    %78 = vmatpush1.msra.mxu0 0.0
    %79 = vmatprep.subr.mxu0 0.0
    %80 = vmatpush1.msra.mxu0 0.0
    %81 = vmatprep.subr.mxu0 0.0
    %82 = vmatpush1.msra.mxu0 0.0
    %83 = vmatprep.subr.mxu0 0.0
    %84 = vmatpush1.msra.mxu0 0.0
    %85 = vmatprep.subr.mxu0 0.0
    %86 = vmatpush1.msra.mxu0 0.0
    %87 = vmatprep.subr.mxu0 0.0
    %88 = vmatpush1.msra.mxu0 0.0
    %89 = vmatprep.subr.mxu0 0.0
    %90 = vmatpush1.msra.mxu0 0.0
    %91 = vmatprep.subr.mxu0 0.0
    %92 = vmatpush1.msra.mxu0 0.0
    %93 = vmatprep.subr.mxu0 0.0
    %94 = vmatpush1.msra.mxu0 0.0
    %95 = vmatprep.subr.mxu0 0.0
    %96 = vmatpush1.msra.mxu0 0.0
    %97 = vmatprep.subr.mxu0 0.0
    %98 = vmatpush1.msra.mxu0 0.0
    %99 = vmatprep.subr.mxu0 0.0
    %100 = vmatpush1.msra.mxu0 0.0
    %101 = vmatprep.subr.mxu0 0.0
    %102 = vmatpush1.msra.mxu0 0.0
    %103 = vmatprep.subr.mxu0 0.0
    %104 = vmatpush1.msra.mxu0 0.0
    %105 = vmatprep.subr.mxu0 0.0
    %106 = vmatpush1.msra.mxu0 0.0
    %107 = vmatprep.subr.mxu0 0.0
    %108 = vmatpush1.msra.mxu0 0.0
    %109 = vmatprep.subr.mxu0 0.0
    %110 = vmatpush1.msra.mxu0 0.0
    %111 = vmatprep.subr.mxu0 0.0
    %112 = vmatpush1.msra.mxu0 0.0
    %113 = vmatprep.subr.mxu0 0.0
    %114 = vmatpush1.msra.mxu0 0.0
    %115 = vmatprep.subr.mxu0 0.0
    %116 = vmatpush1.msra.mxu0 0.0
    %117 = vmatprep.subr.mxu0 0.0
    %118 = vmatpush1.msra.mxu0 0.0
    %119 = vmatprep.subr.mxu0 0.0
    %120 = vmatpush1.msra.mxu0 0.0
    %121 = vmatprep.subr.mxu0 0.0
    %122 = vmatpush1.msra.mxu0 0.0
    %123 = vmatprep.subr.mxu0 0.0
    %124 = vmatpush1.msra.mxu0 0.0
    %125 = vmatprep.subr.mxu0 0.0
    %126 = vmatpush1.msra.mxu0 0.0
    %127 = vmatprep.mubr.f32.mxu0 0.0
    %128 = vmatmul.mubr.f32.gmra.mrb[0].mxu0 %v58
    %v129 = vpop.f32.mrb[0].mxu0
    %v130 = vadd.f32 %v54, %v129
    %v131 = vpop.f32.mrb[0].mxu0
    %132 = vmatprep.mubr.f32.mxu0 0.0
    %133 = vmatmul.mubr.f32.gmra.mrb[0].mxu0 %v61
    %v134 = vpop.f32.mrb[0].mxu0
    %v135 = vadd.f32 %v54, %v134
    %v136 = vpop.f32.mrb[0].mxu0
    %137 = vdwg.mxu0
    %vm138 = vcmask 785408
    %139 = vst.msk [vmem:[#allocation7] sm:$0xff] %vm138, %v130
    %140 = vst.msk [vmem:[#allocation7 + $0x8] sm:$0xff] %vm138, %v135
    // Predicated region
    $region22: #{tpu_custom_call.1} parent=1 // pred_check
      _
    $region23: #{tpu_custom_call.1} parent=1 // pred_check_branch
      %142 = sbr.rel (0) target = $region25
    $region24: #{tpu_custom_call.1} parent=1 // pred_region
      %s144 = ssub.s32 256, 256
      %145 = vsyncadd [#allocation4], %s144
      %s146 = sshll.u32 [#allocation7], 4
      %s147 = int_to_ptr.vmem [resolvable:$true] %s146
      %152 = dma.vmem_to_hbm [thread:$0]  %s147, 256, %s3, [#allocation4], 128, 128, 8
    $region25: #{tpu_custom_call.1} parent=1 // pred_fallthru
      _
    // Predicated region
    $region26: #{tpu_custom_call.1} parent=1 // pred_check
      _
    $region27: #{tpu_custom_call.1} parent=1 // pred_check_branch
      %154 = sbr.rel (0) target = $region29
    $region28: #{tpu_custom_call.1} parent=1 // pred_region
      %155 = dma.done [#allocation4], 256
    $region29: #{tpu_custom_call.1} parent=1 // pred_fallthru
      _
    %156 = vsyncpa [#allocation3], 1
    %157 = vsyncpa [#allocation6], 1
    %158 = vsyncpa [#allocation4], 1

</llo_original>
